<compile_context>
chip_gen: v7x
topology: tpu7x:2x2x1
jax: 0.10.0
libtpu: 0.0.40
codegen_flags: <defaults>
</compile_context>

<pallas_src>
import jax
import jax.numpy as jnp
from jax.experimental import pallas as pl
from jax.experimental.pallas import tpu as pltpu


def _upsample1d_kernel(x_ref, fix_ref, w_ref, b_ref, out_ref):
    tb, tl, c = x_ref.shape

    # One wide MXU matmul: (TB*TL, C) @ (C, 4C) -> taps [x@W1 | x@W2 | x@W3 | x@W0].
    # The reshape only collapses leading dims (TL % 8 == 0) -> layout preserving.
    x2 = x_ref[...].reshape(tb * tl, c)
    y = jnp.dot(x2, w_ref[...], preferred_element_type=jnp.float32)
    y = y.reshape(tb, tl, 4 * c)

    # Per-tile halo corrections, precomputed in the wrapper (f32):
    #   fix[:, 0] = x[j = -1] @ W3   (zeros at sequence start)
    #   fix[:, 1] = x[j = TL] @ W0   (zeros at sequence end)
    fix = fix_ref[...].reshape(tb, 2, c)
    prev_fix = fix[:, 0:1, :]                      # (TB, 1, C)
    next_fix = fix[:, 1:2, :]                      # (TB, 1, C)

    bias = b_ref[...]                              # (1, C) -> broadcasts over (TB, TL, C)

    # even[j] = x[j]@W1 + x[j-1]@W3 ; odd[j] = x[j]@W2 + x[j+1]@W0.
    # The row shifts are done on the matmul outputs (sublane slice + concat);
    # boundary rows come straight from the precomputed fixes -> no iota/where.
    w3_shift = jnp.concatenate([prev_fix, y[:, : tl - 1, 2 * c:3 * c]], axis=1)
    w0_shift = jnp.concatenate([y[:, 1:, 3 * c:4 * c], next_fix], axis=1)
    even = y[:, :, :c] + w3_shift + bias
    odd = y[:, :, c:2 * c] + w0_shift + bias

    # Single lane-dense store of the interleaved [even | odd] block (2C lanes).
    out_ref[...] = jnp.concatenate([even, odd], axis=-1).astype(out_ref.dtype)


def _vmem_capacity_bytes():
    try:
        return int(pltpu.get_tpu_info().vmem_capacity_bytes)
    except Exception:
        return 64 * 1024 * 1024          # conservative (v7x-sized) fallback


def _choose_tiles(B, L, C, itemsize):
    """Pick (TB, TL): the largest per-step block whose pipelined working set fits
    a generation-keyed VMEM budget, keeping the grid >= 2 steps when possible so
    both TensorCores (v7x) / megacore halves get work."""
    cap = _vmem_capacity_bytes()
    budget = (3 * cap) // 8              # working-set target; leaves pipeline headroom

    align = 8 if itemsize >= 4 else 16   # bf16 sublane packing wants multiples of 16
    if L % align == 0:
        tls = [t for t in range(align, L + 1, align) if L % t == 0]
    else:
        tls = [L]                        # full-extent block is always legal
    tbs = [d for d in range(1, B + 1) if B % d == 0]

    def working_set(tb, tl):
        rows = tb * tl
        io = rows * C * (2 * itemsize + 4 * itemsize)     # 2x input + 2x output buffers
        temps = rows * C * 4 * 12                          # y4, shifts, even/odd, concat (f32)
        weight = 6 * C * C * itemsize                      # packed (C,4C) weight + headroom
        return io + temps + weight + 64 * 1024

    best_tb, best_tl, best_rows = tbs[0], tls[0], 0
    for tb in tbs:
        for tl in tls:
            if working_set(tb, tl) <= budget and tb * tl > best_rows:
                best_tb, best_tl, best_rows = tb, tl, tb * tl

    # Keep at least two grid steps when possible (v7x has 2 TCs per chip).
    if (B // best_tb) * (L // best_tl) < 2:
        if best_tb > 1:
            best_tb = max(d for d in tbs if d < best_tb)
        elif len(tls) > 1 and best_tl == L:
            best_tl = max(t for t in tls if t < best_tl)
    return best_tb, best_tl


def _const_spec(shape, nbytes):
    """BlockSpec for grid-constant operands (weight/bias). Large ones are
    single-buffered (default is double-buffering) to free VMEM for data tiles."""
    index_map = lambda bb, t: (0,) * len(shape)
    if nbytes >= (1 << 21):
        try:
            return pl.BlockSpec(shape, index_map, pipeline_mode=pl.Buffered(1))
        except TypeError:                 # older jax without pipeline_mode support
            pass
    return pl.BlockSpec(shape, index_map)


def upsample1d_blc(x, weight, bias, *, tb=None, tl=None, compute_dtype=None):
    """Channels-last entry point.
    x: (B, L, C); weight: (C_in, C_out, 4) (ConvTranspose1d layout); bias: (C,).
    Returns (B, 2L, C)."""
    B, L, C = x.shape
    out_dtype = x.dtype
    if compute_dtype is not None:        # e.g. jnp.bfloat16 on v6e / v7x
        x = x.astype(compute_dtype)
    itemsize = jnp.dtype(x.dtype).itemsize

    auto_tb, auto_tl = _choose_tiles(B, L, C, itemsize)
    tb = auto_tb if tb is None else tb
    tl = auto_tl if tl is None else tl
    assert B % tb == 0 and L % tl == 0, (B, tb, L, tl)
    nb, nt = B // tb, L // tl

    # Packed taps: columns [W1 | W2 | W3 | W0]  ->  y = x @ W4 gives all four taps.
    w0, w1, w2, w3 = (weight[:, :, k] for k in range(4))          # each (C_in, C_out)
    w_packed = jnp.concatenate([w1, w2, w3, w0], axis=1).astype(x.dtype)   # (C, 4C)
    b_packed = bias.reshape(1, C).astype(jnp.float32)

    # Per-tile halo corrections (2 tiny rows per sequence tile), f32, merged into
    # ONE side input so the kernel needs a single extra DMA per step.
    xf = x.astype(jnp.float32)
    zrow = jnp.zeros((B, 1, C), jnp.float32)
    prev_rows = jnp.concatenate([zrow, xf[:, tl - 1:L - 1:tl, :]], axis=1)   # (B, nT, C)
    next_rows = jnp.concatenate([xf[:, tl:L:tl, :], zrow], axis=1)           # (B, nT, C)
    prev_fix = jnp.einsum('btc,cd->btd', prev_rows, w3.astype(jnp.float32))  # x[j-1] @ W3
    next_fix = jnp.einsum('btc,cd->btd', next_rows, w0.astype(jnp.float32))  # x[j+1] @ W0
    fix = jnp.stack([prev_fix, next_fix], axis=2)                            # (B, nT, 2, C)

    cap = _vmem_capacity_bytes()
    vmem_limit = int(min((3 * cap) // 4, 100 * 1024 * 1024))

    out = pl.pallas_call(
        _upsample1d_kernel,
        out_shape=jax.ShapeDtypeStruct((B, L, 2 * C), out_dtype),
        grid_spec=pltpu.PrefetchScalarGridSpec(
            num_scalar_prefetch=0,
            grid=(nb, nt),
            in_specs=[
                pl.BlockSpec((tb, tl, C), lambda bb, t: (bb, t, 0)),
                pl.BlockSpec((tb, 1, 2, C), lambda bb, t: (bb, t, 0, 0)),
                _const_spec((C, 4 * C), w_packed.size * itemsize),
                _const_spec((1, C), 4 * C),
            ],
            out_specs=pl.BlockSpec((tb, tl, 2 * C), lambda bb, t: (bb, t, 0)),
        ),
        compiler_params=pltpu.CompilerParams(
            dimension_semantics=("parallel", "parallel"),
            vmem_limit_bytes=vmem_limit),
    )(x, fix, w_packed, b_packed)

    # (B, L, 2C) -> (B, 2L, C) is layout-preserving: even/odd are already interleaved.
    return out.reshape(B, 2 * L, C)


def upsample1d(x_ncl, weight, bias, *, tb=None, tl=None, compute_dtype=None):
    """PyTorch-layout entry point: x_ncl (B, C, L) -> (B, C, 2L).
    If the surrounding model is channels-last, use upsample1d_blc directly and
    skip these two full-tensor transposes."""
    y_blc = upsample1d_blc(jnp.transpose(x_ncl, (0, 2, 1)), weight, bias,
                           tb=tb, tl=tl, compute_dtype=compute_dtype)
    return jnp.transpose(y_blc, (0, 2, 1))


def _reference_conv_transpose1d(x_ncl, weight, bias):
    """Direct, loop-based reference following the ConvTranspose1d definition."""
    B, C, L = x_ncl.shape
    K, stride, pad = 4, 2, 1
    Lout = (L - 1) * stride - 2 * pad + K
    out = jnp.zeros((B, C, Lout), dtype=jnp.float32)
    for l in range(L):
        for k in range(K):
            t = l * stride - pad + k
            if 0 <= t < Lout:
                out = out.at[:, :, t].add(
                    jnp.einsum('bi,io->bo', x_ncl[:, :, l], weight[:, :, k]))
    return out + bias[None, :, None]


if __name__ == "__main__":
    B, C, L = 2, 8, 16  # dim = 8 channels, sequence length 16

    key = jax.random.PRNGKey(0)
    kx, kw, kb = jax.random.split(key, 3)
    x = jax.random.normal(kx, (B, C, L), dtype=jnp.float32)
    # ConvTranspose1d weight shape: (in_channels, out_channels, kernel_size)
    weight = jax.random.normal(kw, (C, C, 4), dtype=jnp.float32) * 0.1
    bias = jax.random.normal(kb, (C,), dtype=jnp.float32) * 0.1

    y_ref = _reference_conv_transpose1d(x, weight, bias)

    # Multi-tile sequence path (TL=8 -> two sequence tiles; exercises the halo fixes).
    y_tiled = jax.block_until_ready(upsample1d(x, weight, bias, tb=1, tl=8))
    assert y_tiled.shape == (B, C, 2 * L), y_tiled.shape
    assert jnp.allclose(y_tiled, y_ref, atol=1e-5, rtol=1e-5), \
        float(jnp.max(jnp.abs(y_tiled - y_ref)))

    # Batch-blocked path (TB=2 -> both batches in one step; exercises TB > 1).
    y_batched = jax.block_until_ready(upsample1d(x, weight, bias, tb=2, tl=8))
    assert jnp.allclose(y_batched, y_ref, atol=1e-5, rtol=1e-5), \
        float(jnp.max(jnp.abs(y_batched - y_ref)))

    # Auto-tiled path (VMEM-budgeted TB/TL selection).
    y_auto = jax.block_until_ready(upsample1d(x, weight, bias))
    assert jnp.allclose(y_auto, y_ref, atol=1e-5, rtol=1e-5), \
        float(jnp.max(jnp.abs(y_auto - y_ref)))

    print("KERNEL_OK")
</pallas_src>

<mosaic_0001>
module attributes {stable_mosaic.version = 11 : i64} {
  func.func @_upsample1d_kernel(%arg0: i32, %arg1: i32, %arg2: memref<1x8x8xf32, #tpu.memory_space<vmem>>, %arg3: memref<1x1x2x8xf32, #tpu.memory_space<vmem>>, %arg4: memref<8x32xf32, #tpu.memory_space<vmem>>, %arg5: memref<1x8xf32, #tpu.memory_space<vmem>>, %arg6: memref<1x8x16xf32, #tpu.memory_space<vmem>>) attributes {dimension_semantics = [#tpu.dimension_semantics<parallel>, #tpu.dimension_semantics<parallel>], iteration_bounds = array<i64: 2, 2>, scalar_prefetch = 0 : i64, scratch_operands = 0 : i64, tpu.core_type = #tpu.core_type<tc>, window_params = [{transform_indices = @transform_0, window_bounds = array<i64: 1, 8, 8>}, {transform_indices = @transform_1, window_bounds = array<i64: 1, 1, 2, 8>}, {pipeline_mode = #tpu.pipeline_mode<synchronous>, transform_indices = @transform_2, window_bounds = array<i64: 8, 32>}, {pipeline_mode = #tpu.pipeline_mode<synchronous>, transform_indices = @transform_3, window_bounds = array<i64: 1, 8>}, {transform_indices = @transform_4, window_bounds = array<i64: 1, 8, 16>}]} {
    %c0 = arith.constant 0 : index
    %c0_0 = arith.constant 0 : index
    %c0_1 = arith.constant 0 : index
    %0 = vector.load %arg2[%c0, %c0_0, %c0_1] : memref<1x8x8xf32, #tpu.memory_space<vmem>>, vector<1x8x8xf32>
    %1 = vector.shape_cast %0 : vector<1x8x8xf32> to vector<8x8xf32>
    %c0_2 = arith.constant 0 : index
    %c0_3 = arith.constant 0 : index
    %2 = vector.load %arg4[%c0_2, %c0_3] : memref<8x32xf32, #tpu.memory_space<vmem>>, vector<8x32xf32>
    %cst = arith.constant dense<0.000000e+00> : vector<8x32xf32>
    %3 = tpu.matmul %1, %2, %cst {dimension_numbers = #tpu.dot_dimension_numbers<[1], [0], [0], [1], [0, 0, 1, 1], [], []>} : vector<8x8xf32>, vector<8x32xf32>, vector<8x32xf32> -> vector<8x32xf32>
    %4 = vector.shape_cast %3 : vector<8x32xf32> to vector<1x8x32xf32>
    %c0_4 = arith.constant 0 : index
    %c0_5 = arith.constant 0 : index
    %c0_6 = arith.constant 0 : index
    %c0_7 = arith.constant 0 : index
    %5 = vector.load %arg3[%c0_4, %c0_5, %c0_6, %c0_7] : memref<1x1x2x8xf32, #tpu.memory_space<vmem>>, vector<1x1x2x8xf32>
    %6 = vector.shape_cast %5 : vector<1x1x2x8xf32> to vector<1x2x8xf32>
    %7 = vector.extract_strided_slice %6 {offsets = [0, 0, 0], sizes = [1, 1, 8], strides = [1, 1, 1]} : vector<1x2x8xf32> to vector<1x1x8xf32>
    %8 = vector.extract_strided_slice %6 {offsets = [0, 1, 0], sizes = [1, 1, 8], strides = [1, 1, 1]} : vector<1x2x8xf32> to vector<1x1x8xf32>
    %c0_8 = arith.constant 0 : index
    %c0_9 = arith.constant 0 : index
    %9 = vector.load %arg5[%c0_8, %c0_9] : memref<1x8xf32, #tpu.memory_space<vmem>>, vector<1x8xf32>
    %10 = vector.extract_strided_slice %4 {offsets = [0, 0, 16], sizes = [1, 7, 8], strides = [1, 1, 1]} : vector<1x8x32xf32> to vector<1x7x8xf32>
    %11 = tpu.concatenate %7, %10 in 1 : vector<1x1x8xf32>, vector<1x7x8xf32> -> vector<1x8x8xf32>
    %12 = vector.extract_strided_slice %4 {offsets = [0, 1, 24], sizes = [1, 7, 8], strides = [1, 1, 1]} : vector<1x8x32xf32> to vector<1x7x8xf32>
    %13 = tpu.concatenate %12, %8 in 1 : vector<1x7x8xf32>, vector<1x1x8xf32> -> vector<1x8x8xf32>
    %14 = vector.extract_strided_slice %4 {offsets = [0, 0, 0], sizes = [1, 8, 8], strides = [1, 1, 1]} : vector<1x8x32xf32> to vector<1x8x8xf32>
    %15 = arith.addf %14, %11 : vector<1x8x8xf32>
    %16 = vector.shape_cast %9 : vector<1x8xf32> to vector<1x1x8xf32>
    %17 = vector.broadcast %16 : vector<1x1x8xf32> to vector<1x8x8xf32>
    %18 = arith.addf %15, %17 : vector<1x8x8xf32>
    %19 = vector.extract_strided_slice %4 {offsets = [0, 0, 8], sizes = [1, 8, 8], strides = [1, 1, 1]} : vector<1x8x32xf32> to vector<1x8x8xf32>
    %20 = arith.addf %19, %13 : vector<1x8x8xf32>
    %21 = vector.shape_cast %9 : vector<1x8xf32> to vector<1x1x8xf32>
    %22 = vector.broadcast %21 : vector<1x1x8xf32> to vector<1x8x8xf32>
    %23 = arith.addf %20, %22 : vector<1x8x8xf32>
    %24 = tpu.concatenate %18, %23 in 2 : vector<1x8x8xf32>, vector<1x8x8xf32> -> vector<1x8x16xf32>
    %c0_10 = arith.constant 0 : index
    %c0_11 = arith.constant 0 : index
    %c0_12 = arith.constant 0 : index
    %25 = vector.load %arg6[%c0_10, %c0_11, %c0_12] : memref<1x8x16xf32, #tpu.memory_space<vmem>>, vector<1x8x16xf32>
    tpu.vector_store %arg6[%c0_10, %c0_11, %c0_12], %24 {strides = array<i32>} : memref<1x8x16xf32, #tpu.memory_space<vmem>>, vector<1x8x16xf32>,
    return
  }
  func.func @transform_0(%arg0: i32, %arg1: i32) -> (i32, i32, i32) {
    %c0_i32 = arith.constant 0 : i32
    %c0_i32_0 = arith.constant 0 : i32
    return %arg0, %arg1, %c0_i32 : i32, i32, i32
  }
  func.func @transform_1(%arg0: i32, %arg1: i32) -> (i32, i32, i32, i32) {
    %c0_i32 = arith.constant 0 : i32
    %c0_i32_0 = arith.constant 0 : i32
    %c0_i32_1 = arith.constant 0 : i32
    return %arg0, %arg1, %c0_i32, %c0_i32_0 : i32, i32, i32, i32
  }
  func.func @transform_2(%arg0: i32, %arg1: i32) -> (i32, i32) {
    %c0_i32 = arith.constant 0 : i32
    %c0_i32_0 = arith.constant 0 : i32
    %c0_i32_1 = arith.constant 0 : i32
    return %c0_i32, %c0_i32_0 : i32, i32
  }
  func.func @transform_3(%arg0: i32, %arg1: i32) -> (i32, i32) {
    %c0_i32 = arith.constant 0 : i32
    %c0_i32_0 = arith.constant 0 : i32
    %c0_i32_1 = arith.constant 0 : i32
    return %c0_i32, %c0_i32_0 : i32, i32
  }
  func.func @transform_4(%arg0: i32, %arg1: i32) -> (i32, i32, i32) {
    %c0_i32 = arith.constant 0 : i32
    %c0_i32_0 = arith.constant 0 : i32
    return %arg0, %arg1, %c0_i32 : i32, i32, i32
  }
}

</mosaic_0001>

<llo_original>
// kernel: tpu_custom_call.1
$region0: #{tpu_custom_call.1}
  #allocation0 [shape = 'u32[]', space=smem, size = 0x4, offset = 0x4, fixed_abs, tag = 'smem constant byte address 0x4 - core index']
  #allocation1 [shape = 'u32[144,128]{1,0:T(1,128)}', space=vmem, size = 0x12000, scoped, tag = 'internal scratch']
  %s0 = inlined_call_operand.vmem [shape: f32[2,16,8], index: 0, kind: input, shape index: {}]
  %s1 = inlined_call_operand.vmem [shape: f32[2,2,2,8], index: 1, kind: input, shape index: {}]
  %s2 = inlined_call_operand.vmem [shape: f32[8,32], index: 2, kind: input, shape index: {}]
  %s3 = inlined_call_operand.vmem [shape: f32[1,8], index: 3, kind: input, shape index: {}]
  %s4 = inlined_call_operand.hbm [shape: f32[2,16,16], index: 4, kind: output, shape index: {}]
  %s5 = sld [smem:[#allocation0]]
  $region49: #{tpu_custom_call.1} parent=0
    _
  %s7 = ssub.s32 1, %s5
  %s8 = scalar_select 0, %s7, %s5
  $region1: #{tpu_custom_call.1} parent=0
    #allocation2 [shape = 'u8[8192]{0}', space=vmem, size = 0x2000, scoped, tag = 'output window, operand 0']
    #allocation3 [shape = 's32[2]{0}', space=sflag, size = 0x8, scoped, tag = 'scoped memory for tpu_custom_call.1']
    %9 = vsyncpa [#allocation3], 0
    %s10 = scalar_lea.sflag [#allocation3], 1
    %11 = vsyncpa %s10, 0
    loop: start=0, step=1, limit=6
    $region2: #{tpu_custom_call.1} parent=1 // loop_pre_header
      _
    $region3: #{tpu_custom_call.1} parent=1 // loop_header
      %s13 = sphi 0, %s17
      %p14 = scmp.ge.s32.totalorder %s13, 6
      %s20 = sphi 0, %s32
      %s21 = sphi 0, %s28
      %s22 = sphi 0, %s20
      %s23 = sphi 0, %s21
      %s24 = sphi 0, %s22
      %s25 = sphi 0, %s23
      %s37 = sphi 0, %s39
      %s40 = sphi 0, %s37
      %s41 = sphi 0, %s40
      %s57 = sphi 0, %s41
      %s65 = sphi 0, %s67
      %s68 = sphi 0, %s65
      %s69 = sphi 0, %s68
      %s85 = sphi 0, %s69
      %s89 = sphi 0, %s89
      %s91 = sphi 0, %s89
      %s92 = sphi 0, %s91
      %s106 = sphi 0, %s92
      %s110 = sphi 0, %s110
      %s112 = sphi 0, %s110
      %s113 = sphi 0, %s112
      %s127 = sphi 0, %s113
      %s135 = sphi 0, %s137
      %s138 = sphi 0, %s135
      %s139 = sphi 0, %s138
      %s155 = sphi 0, %s139
    $region4: #{tpu_custom_call.1} parent=1 // loop_header_branch
      %16 = sbr.rel (%p14) target = $region8
    $region5: #{tpu_custom_call.1} parent=1 // loop_body
      %s18 = ssub.s32 %s13, 1
      %s19 = ssub.s32 %s13, 2
      %s26 = sadd.s32 1, %s21
      %p27 = scmp.ge.s32.totalorder %s26, 2
      %s28 = scalar_select %p27, 0, %s26
      %s29 = sadd.s32 1, %s20
      %s30 = scalar_select %p27, %s29, %s20
      %p31 = scmp.ge.s32.totalorder %s30, 2
      %s32 = scalar_select %p31, 0, %s30
      %s33 = ssub.s32 %s20, %s32
      %s34 = ssub.s32 %s21, %s28
      %s35 = sor.u32 %s33, %s34
      %p36 = scmp.eq.s32.totalorder %s35, 0
      %s38 = sadd.s32 %s37, 1
      %s39 = scalar_select %p36, %s37, %s38
      %p42 = pneg %p36
      %p43 = scmp.eq.s32.totalorder %s13, 3
      %p44 = por %p42, %p43
      %p45 = scmp.ne.s32.totalorder %s37, %s40
      %p46 = scmp.eq.s32.totalorder %s13, 0
      %p47 = por %p45, %p46
      %p48 = scmp.ne.s32.totalorder %s37, %s40
      %p49 = scmp.eq.s32.totalorder %s18, 3
      %p50 = por %p48, %p49
      %p51 = scmp.ne.s32.totalorder %s40, %s41
      %p52 = scmp.eq.s32.totalorder %s18, 0
      %p53 = por %p51, %p52
      %p54 = scmp.ne.s32.totalorder %s40, %s41
      %p55 = scmp.eq.s32.totalorder %s19, 3
      %p56 = por %p54, %p55
      %p58 = scmp.ne.s32.totalorder %s41, %s57
      %p59 = scmp.eq.s32.totalorder %s19, 0
      %p60 = por %p58, %p59
      %s61 = ssub.s32 %s20, %s32
      %s62 = ssub.s32 %s21, %s28
      %s63 = sor.u32 %s61, %s62
      %p64 = scmp.eq.s32.totalorder %s63, 0
      %s66 = sadd.s32 %s65, 1
      %s67 = scalar_select %p64, %s65, %s66
      %p70 = pneg %p64
      %p71 = scmp.eq.s32.totalorder %s13, 3
      %p72 = por %p70, %p71
      %p73 = scmp.ne.s32.totalorder %s65, %s68
      %p74 = scmp.eq.s32.totalorder %s13, 0
      %p75 = por %p73, %p74
      %p76 = scmp.ne.s32.totalorder %s65, %s68
      %p77 = scmp.eq.s32.totalorder %s18, 3
      %p78 = por %p76, %p77
      %p79 = scmp.ne.s32.totalorder %s68, %s69
      %p80 = scmp.eq.s32.totalorder %s18, 0
      %p81 = por %p79, %p80
      %p82 = scmp.ne.s32.totalorder %s68, %s69
      %p83 = scmp.eq.s32.totalorder %s19, 3
      %p84 = por %p82, %p83
      %p86 = scmp.ne.s32.totalorder %s69, %s85
      %p87 = scmp.eq.s32.totalorder %s19, 0
      %p88 = por %p86, %p87
      %s90 = sadd.s32 %s89, 1
      %p93 = scmp.eq.s32.totalorder %s13, 3
      %p94 = scmp.ne.s32.totalorder %s89, %s91
      %p95 = scmp.eq.s32.totalorder %s13, 0
      %p96 = por %p94, %p95
      %p97 = scmp.ne.s32.totalorder %s89, %s91
      %p98 = scmp.eq.s32.totalorder %s18, 3
      %p99 = por %p97, %p98
      %p100 = scmp.ne.s32.totalorder %s91, %s92
      %p101 = scmp.eq.s32.totalorder %s18, 0
      %p102 = por %p100, %p101
      %p103 = scmp.ne.s32.totalorder %s91, %s92
      %p104 = scmp.eq.s32.totalorder %s19, 3
      %p105 = por %p103, %p104
      %p107 = scmp.ne.s32.totalorder %s92, %s106
      %p108 = scmp.eq.s32.totalorder %s19, 0
      %p109 = por %p107, %p108
      %s111 = sadd.s32 %s110, 1
      %p114 = scmp.eq.s32.totalorder %s13, 3
      %p115 = scmp.ne.s32.totalorder %s110, %s112
      %p116 = scmp.eq.s32.totalorder %s13, 0
      %p117 = por %p115, %p116
      %p118 = scmp.ne.s32.totalorder %s110, %s112
      %p119 = scmp.eq.s32.totalorder %s18, 3
      %p120 = por %p118, %p119
      %p121 = scmp.ne.s32.totalorder %s112, %s113
      %p122 = scmp.eq.s32.totalorder %s18, 0
      %p123 = por %p121, %p122
      %p124 = scmp.ne.s32.totalorder %s112, %s113
      %p125 = scmp.eq.s32.totalorder %s19, 3
      %p126 = por %p124, %p125
      %p128 = scmp.ne.s32.totalorder %s113, %s127
      %p129 = scmp.eq.s32.totalorder %s19, 0
      %p130 = por %p128, %p129
      %s131 = ssub.s32 %s20, %s32
      %s132 = ssub.s32 %s21, %s28
      %s133 = sor.u32 %s131, %s132
      %p134 = scmp.eq.s32.totalorder %s133, 0
      %s136 = sadd.s32 %s135, 1
      %s137 = scalar_select %p134, %s135, %s136
      %p140 = pneg %p134
      %p141 = scmp.eq.s32.totalorder %s13, 3
      %p142 = por %p140, %p141
      %p143 = scmp.ne.s32.totalorder %s135, %s138
      %p144 = scmp.eq.s32.totalorder %s13, 0
      %p145 = por %p143, %p144
      %p146 = scmp.ne.s32.totalorder %s135, %s138
      %p147 = scmp.eq.s32.totalorder %s18, 3
      %p148 = por %p146, %p147
      %p149 = scmp.ne.s32.totalorder %s138, %s139
      %p150 = scmp.eq.s32.totalorder %s18, 0
      %p151 = por %p149, %p150
      %p152 = scmp.ne.s32.totalorder %s138, %s139
      %p153 = scmp.eq.s32.totalorder %s19, 3
      %p154 = por %p152, %p153
      %p156 = scmp.ne.s32.totalorder %s139, %s155
      %p157 = scmp.eq.s32.totalorder %s19, 0
      %p158 = por %p156, %p157
      %p159 = scmp.le.s32.totalorder 1, %s13
      %p160 = scmp.lt.s32.totalorder %s13, 5
      %p161 = pnand %p159, %p160
      %p162 = pneg %p161
      // Predicated region
      $region9: #{tpu_custom_call.1} parent=5 // pred_check
        _
      $region10: #{tpu_custom_call.1} parent=5 // pred_check_branch
        %164 = sbr.rel (%p161) target = $region12
      $region11: #{tpu_custom_call.1} parent=5 // pred_region
        %s165 = ssub.s32 %s13, 1
        // Predicated region
        $region13: #{tpu_custom_call.1} parent=11 // pred_check
          %p166 = pneg %p102
        $region14: #{tpu_custom_call.1} parent=11 // pred_check_branch
          %168 = sbr.rel (%p166) target = $region16
        $region15: #{tpu_custom_call.1} parent=11 // pred_region
          _
        $region16: #{tpu_custom_call.1} parent=11 // pred_fallthru
          _
        // Predicated region
        $region17: #{tpu_custom_call.1} parent=11 // pred_check
          %p169 = pneg %p123
        $region18: #{tpu_custom_call.1} parent=11 // pred_check_branch
          %171 = sbr.rel (%p169) target = $region20
        $region19: #{tpu_custom_call.1} parent=11 // pred_region
          _
        $region20: #{tpu_custom_call.1} parent=11 // pred_fallthru
          _
      $region12: #{tpu_custom_call.1} parent=5 // pred_fallthru
        _
      %p172 = scmp.lt.s32.totalorder %s13, 4
      // Predicated region
      $region21: #{tpu_custom_call.1} parent=5 // pred_check
        %p173 = pneg %p172
      $region22: #{tpu_custom_call.1} parent=5 // pred_check_branch
        %175 = sbr.rel (%p173) target = $region24
      $region23: #{tpu_custom_call.1} parent=5 // pred_region
        // Predicated region
        $region25: #{tpu_custom_call.1} parent=23 // pred_check
          %p176 = pneg %p47
        $region26: #{tpu_custom_call.1} parent=23 // pred_check_branch
          %178 = sbr.rel (%p176) target = $region28
        $region27: #{tpu_custom_call.1} parent=23 // pred_region
          %p179 = scmp.lt.s32.totalorder %s20, 1
          %s180 = scalar_select %p179, %s20, 1
          %p181 = scmp.lt.s32.totalorder %s21, 1
          %s182 = scalar_select %p181, %s21, 1
          %s183 = smul.addr %s180, 2
          %s184 = sadd.s32 %s182, %s183
          %s185 = smul.addr %s184, 8
          %s186 = scalar_lea.vmem %s0, %s185
        $region28: #{tpu_custom_call.1} parent=23 // pred_fallthru
          _
        // Predicated region
        $region29: #{tpu_custom_call.1} parent=23 // pred_check
          %p187 = pneg %p75
        $region30: #{tpu_custom_call.1} parent=23 // pred_check_branch
          %189 = sbr.rel (%p187) target = $region32
        $region31: #{tpu_custom_call.1} parent=23 // pred_region
          %p190 = scmp.lt.s32.totalorder %s20, 1
          %s191 = scalar_select %p190, %s20, 1
          %p192 = scmp.lt.s32.totalorder %s21, 1
          %s193 = scalar_select %p192, %s21, 1
          %s194 = smul.addr %s191, 2
          %s195 = sadd.s32 %s193, %s194
          %s196 = smul.addr %s195, 2
          %s197 = scalar_lea.vmem %s1, %s196
        $region32: #{tpu_custom_call.1} parent=23 // pred_fallthru
          _
      $region24: #{tpu_custom_call.1} parent=5 // pred_fallthru
        _
      %p198 = scmp.le.s32.totalorder 1, %s13
      %p199 = scmp.lt.s32.totalorder %s13, 5
      %p200 = pnand %p198, %p199
      %p201 = pneg %p200
      // Predicated region
      $region33: #{tpu_custom_call.1} parent=5 // pred_check
        _
      $region34: #{tpu_custom_call.1} parent=5 // pred_check_branch
        %203 = sbr.rel (%p200) target = $region36
      $region35: #{tpu_custom_call.1} parent=5 // pred_region
        %s204 = ssub.s32 %s13, 1
        %p205 = scmp.lt.s32.totalorder %s22, 1
        %s206 = scalar_select %p205, %s22, 1
        %p207 = scmp.lt.s32.totalorder %s23, 1
        %s208 = scalar_select %p207, %s23, 1
        %s209 = smul.addr %s206, 2
        %s210 = sadd.s32 %s208, %s209
        %s211 = smul.addr %s210, 8
        %s212 = scalar_lea.vmem %s0, %s211
        %p213 = pneg %p53
        %p214 = pneg %p50
        %p215 = scmp.lt.s32.totalorder %s22, 1
        %s216 = scalar_select %p215, %s22, 1
        %p217 = scmp.lt.s32.totalorder %s23, 1
        %s218 = scalar_select %p217, %s23, 1
        %s219 = smul.addr %s216, 2
        %s220 = sadd.s32 %s218, %s219
        %s221 = smul.addr %s220, 2
        %s222 = scalar_lea.vmem %s1, %s221
        %p223 = pneg %p81
        %p224 = pneg %p78
        %p225 = pneg %p102
        %p226 = pneg %p99
        %p227 = pneg %p123
        %p228 = pneg %p120
        %p229 = pneg %p151
        %p230 = pneg %p148
        %s231 = sand.u32 %s138, 1
        %s232 = scalar_lea.sflag [#allocation3], %s231
        %s233 = sand.u32 %s138, 1
        %s234 = smul.addr %s233, 8
        %s235 = scalar_lea.vmem [#allocation2], %s234
        %p236 = scmp.lt.s32.totalorder %s22, 1
        %s237 = scalar_select %p236, %s22, 1
        %p238 = scmp.lt.s32.totalorder %s23, 1
        %s239 = scalar_select %p238, %s23, 1
        %s240 = smul.addr %s237, 2
        %s241 = sadd.s32 %s239, %s240
        %s242 = smul.addr %s241, 8
        %s243 = scalar_lea.vmem %s0, %s242
        %p244 = scmp.lt.s32.totalorder %s22, 1
        %s245 = scalar_select %p244, %s22, 1
        %p246 = scmp.lt.s32.totalorder %s23, 1
        %s247 = scalar_select %p246, %s23, 1
        %s248 = smul.addr %s245, 2
        %s249 = sadd.s32 %s247, %s248
        %s250 = smul.addr %s249, 2
        %s251 = scalar_lea.vmem %s1, %s250
        %v252 = vld [vmem:[%s243] sm:$0xff]
        %v253 = vld [vmem:[%s2] sm:$0xff]
        %vm254 = vcmask 64512
        %v256 = vsel %vm254, %v252, 0
        %258 = vmatprep.subr.mxu0 0.0
        %259 = vmatpush1.msra.mxu0 %v253
        %260 = vmatprep.subr.mxu0 0.0
        %261 = vmatpush1.msra.mxu0 0.0
        %262 = vmatprep.subr.mxu0 0.0
        %263 = vmatpush1.msra.mxu0 0.0
        %264 = vmatprep.subr.mxu0 0.0
        %265 = vmatpush1.msra.mxu0 0.0
        %266 = vmatprep.subr.mxu0 0.0
        %267 = vmatpush1.msra.mxu0 0.0
        %268 = vmatprep.subr.mxu0 0.0
        %269 = vmatpush1.msra.mxu0 0.0
        %270 = vmatprep.subr.mxu0 0.0
        %271 = vmatpush1.msra.mxu0 0.0
        %272 = vmatprep.subr.mxu0 0.0
        %273 = vmatpush1.msra.mxu0 0.0
        %274 = vmatprep.subr.mxu0 0.0
        %275 = vmatpush1.msra.mxu0 0.0
        %276 = vmatprep.subr.mxu0 0.0
        %277 = vmatpush1.msra.mxu0 0.0
        %278 = vmatprep.subr.mxu0 0.0
        %279 = vmatpush1.msra.mxu0 0.0
        %280 = vmatprep.subr.mxu0 0.0
        %281 = vmatpush1.msra.mxu0 0.0
        %282 = vmatprep.subr.mxu0 0.0
        %283 = vmatpush1.msra.mxu0 0.0
        %284 = vmatprep.subr.mxu0 0.0
        %285 = vmatpush1.msra.mxu0 0.0
        %286 = vmatprep.subr.mxu0 0.0
        %287 = vmatpush1.msra.mxu0 0.0
        %288 = vmatprep.subr.mxu0 0.0
        %289 = vmatpush1.msra.mxu0 0.0
        %290 = vmatprep.subr.mxu0 0.0
        %291 = vmatpush1.msra.mxu0 0.0
        %292 = vmatprep.subr.mxu0 0.0
        %293 = vmatpush1.msra.mxu0 0.0
        %294 = vmatprep.subr.mxu0 0.0
        %295 = vmatpush1.msra.mxu0 0.0
        %296 = vmatprep.subr.mxu0 0.0
        %297 = vmatpush1.msra.mxu0 0.0
        %298 = vmatprep.subr.mxu0 0.0
        %299 = vmatpush1.msra.mxu0 0.0
        %300 = vmatprep.subr.mxu0 0.0
        %301 = vmatpush1.msra.mxu0 0.0
        %302 = vmatprep.subr.mxu0 0.0
        %303 = vmatpush1.msra.mxu0 0.0
        %304 = vmatprep.subr.mxu0 0.0
        %305 = vmatpush1.msra.mxu0 0.0
        %306 = vmatprep.subr.mxu0 0.0
        %307 = vmatpush1.msra.mxu0 0.0
        %308 = vmatprep.subr.mxu0 0.0
        %309 = vmatpush1.msra.mxu0 0.0
        %310 = vmatprep.subr.mxu0 0.0
        %311 = vmatpush1.msra.mxu0 0.0
        %312 = vmatprep.subr.mxu0 0.0
        %313 = vmatpush1.msra.mxu0 0.0
        %314 = vmatprep.subr.mxu0 0.0
        %315 = vmatpush1.msra.mxu0 0.0
        %316 = vmatprep.subr.mxu0 0.0
        %317 = vmatpush1.msra.mxu0 0.0
        %318 = vmatprep.subr.mxu0 0.0
        %319 = vmatpush1.msra.mxu0 0.0
        %320 = vmatprep.subr.mxu0 0.0
        %321 = vmatpush1.msra.mxu0 0.0
        %322 = vmatprep.mubr.f32.mxu0 0.0
        %323 = vmatmul.mubr.f32.gmra.mrb[0].mxu0 %v256
        %v324 = vpop.f32.mrb[0].mxu0
        %v325 = vadd.f32 0.0, %v324
        %v326 = vpop.f32.mrb[0].mxu0
        %327 = vdwg.mxu0
        %v328 = vld [vmem:[%s251] sm:$0x3]
        %v329 = vld [vmem:[%s3] sm:$0x1]
        %v331 = vrot.slane %v325, 7
        %332 = vrot.lane.b32.xlu0 %v331, 112
        %v333 = vpop.permute.xlu0 %332
        %vm335 = vcmask 1040384
        %v336 = vsel %vm335, %v328, %v333
        %v337 = vrot.slane %v325, 1
        %v340 = vrot.slane %v328, 2
        %341 = vrot.lane.b32.xlu0 %v340, 24
        %v342 = vpop.permute.xlu0 %341
        %vm344 = vcmask 1046528
        %v345 = vsel %vm344, %v337, %v342
        %v346 = vadd.f32 %v325, %v336
        %v348 = vlaneseq
        %v349 = vshrl.u32 %v348, 7
        %v350 = vsub.s32 0, %v349
        %v351 = vrot.slane %v329, %v350
        %v353 = vadd.f32 %v346, %v351
        %355 = vrot.lane.b32.xlu0 %v345, 112
        %v356 = vpop.permute.xlu0 %355
        %v358 = vadd.f32 %v325, %v356
        %359 = vrot.lane.b32.xlu0 %v351, 8
        %v360 = vpop.permute.xlu0 %359
        %v362 = vadd.f32 %v358, %v360
        %v363 = vsel %vm254, %v353, %v362
        %vm364 = vcmask 130048
        %365 = vst.msk [vmem:[%s235] sm:$0xff] %vm364, %v363
        %s366 = sand.u32 %s138, 1
        %s367 = scalar_lea.sflag [#allocation3], %s366
        %s368 = sand.u32 %s138, 1
        %s369 = smul.addr %s368, 8
        %s370 = scalar_lea.vmem [#allocation2], %s369
        // Predicated region
        $region37: #{tpu_custom_call.1} parent=35 // pred_check
          %p371 = pneg %p148
        $region38: #{tpu_custom_call.1} parent=35 // pred_check_branch
          %373 = sbr.rel (%p371) target = $region40
        $region39: #{tpu_custom_call.1} parent=35 // pred_region
          %s375 = ssub.s32 128, 128
          %376 = vsyncadd %s367, %s375
          %s377 = smul.addr %s22, 2
          %s378 = sadd.s32 %s23, %s377
          %s379 = smul.addr %s378, 128
          %s380 = scalar_lea.hbm %s4, %s379
          %s382 = sshll.u32 %s370, 4
          %s383 = int_to_ptr.vmem [resolvable:$true] %s382
          %385 = dma.vmem_to_hbm [thread:$0]  %s383, 128, %s380, %s367
        $region40: #{tpu_custom_call.1} parent=35 // pred_fallthru
          _
      $region36: #{tpu_custom_call.1} parent=5 // pred_fallthru
        _
      %p386 = scmp.le.s32.totalorder 2, %s13
      // Predicated region
      $region41: #{tpu_custom_call.1} parent=5 // pred_check
        %p387 = pneg %p386
      $region42: #{tpu_custom_call.1} parent=5 // pred_check_branch
        %389 = sbr.rel (%p387) target = $region44
      $region43: #{tpu_custom_call.1} parent=5 // pred_region
        %s390 = ssub.s32 %s13, 2
        // Predicated region
        $region45: #{tpu_custom_call.1} parent=43 // pred_check
          %p391 = pneg %p154
        $region46: #{tpu_custom_call.1} parent=43 // pred_check_branch
          %393 = sbr.rel (%p391) target = $region48
        $region47: #{tpu_custom_call.1} parent=43 // pred_region
          %s394 = sand.u32 %s139, 1
          %s395 = scalar_lea.sflag [#allocation3], %s394
          %s396 = sand.u32 %s139, 1
          %s397 = smul.addr %s396, 8
          %s398 = scalar_lea.vmem [#allocation2], %s397
          %399 = dma.done %s395, 128
        $region48: #{tpu_custom_call.1} parent=43 // pred_fallthru
          _
      $region44: #{tpu_custom_call.1} parent=5 // pred_fallthru
        _
    $region6: #{tpu_custom_call.1} parent=1 // loop_footer
      %s17 = sadd.s32 1, %s13
    $region7: #{tpu_custom_call.1} parent=1 // loop_footer_branch
      %12 = sbr.rel target = $region3
    $region8: #{tpu_custom_call.1} parent=1 // loop_exit
      _
    %400 = vsyncpa [#allocation3], 1
    %s401 = scalar_lea.sflag [#allocation3], 1
    %402 = vsyncpa %s401, 1

</llo_original>
